<compile_context>
chip_gen: v5e
topology: v5e:2x2
jax: 0.10.0
libtpu: 0.0.40
codegen_flags: <defaults>
</compile_context>

<pallas_src>
import functools

import jax
import jax.numpy as jnp
from jax.experimental import pallas as pl
from jax.experimental.pallas import tpu as pltpu


NUM_FEATURES = 16
HIDDEN_DIM = 64
OUTPUT_DIM = 32
NUM_NODES = 16
NUM_EDGES = 40
NUM_GRAPHS = 8          # graphs in the fused batch
PAD = 128               # lane-dense padded width for F / H / OUT


def gcn_encoder_kernel(a_ref, x_ref, w_ref, b_ref, pool_ref, out_ref):
    """One chunk of the batch per grid step, block-diagonal adjacency.

    a_ref    [NP, NP]   bf16 block-diagonal normalized adjacency (self loops)
    x_ref    [NP, PAD]  bf16 stacked node features (zero-padded lanes / rows)
    w_ref    [3, PAD, PAD] bf16 stacked W1/W2/W3 (zero-padded)
    b_ref    [8, PAD]   f32  rows 0..2 = b1/b2/b3 (zero-padded)
    pool_ref [GR, NP]   bf16 per-graph mean-pool rows (1/N in that graph's cols)
    out_ref  [GR, PAD]  f32  pooled embeddings (rows beyond graphs-per-chunk = 0)
    """
    a = a_ref[...]
    x = x_ref[...]
    b_all = b_ref[...]

    def layer(h_in, idx):
        # Project features first (small real K), then aggregate over nodes.
        hw = jnp.dot(h_in, w_ref[idx], preferred_element_type=jnp.float32)
        ah = jnp.dot(a, hw.astype(jnp.bfloat16), preferred_element_type=jnp.float32)
        # Bias add + ReLU on the f32 accumulator, cast to bf16 afterwards.
        return jnp.maximum(ah + b_all[idx:idx + 1, :], 0.0).astype(jnp.bfloat16)

    h = layer(x, 0)
    h = layer(h, 1)
    h = layer(h, 2)

    # Batched global_mean_pool as one MXU matmul -> full [GR, PAD] tile store.
    out_ref[...] = jnp.dot(pool_ref[...], h, preferred_element_type=jnp.float32)


def build_blockdiag_adjacency(edge_index_batch, num_nodes):
    """Block-diagonal D^-1/2 (A + I) D^-1/2 over the whole batch.

    One global scatter-add with graph-offset node indices; PyG GCNConv
    convention (edge j->i aggregates at i). Block-diagonal structure guarantees
    graphs cannot mix.
    """
    b, _, e = edge_index_batch.shape
    total = b * num_nodes
    offs = (jnp.arange(b, dtype=jnp.int32) * num_nodes)[:, None]       # [B,1]
    src = (edge_index_batch[:, 0, :] + offs).reshape(-1)               # [B*E]
    dst = (edge_index_batch[:, 1, :] + offs).reshape(-1)               # [B*E]
    a = jnp.zeros((total, total), jnp.float32).at[dst, src].add(1.0)
    a = a + jnp.eye(total, dtype=jnp.float32)                          # self loops
    deg = jnp.sum(a, axis=1)
    dinv = jnp.where(deg > 0, jax.lax.rsqrt(deg), 0.0)
    return dinv[:, None] * a * dinv[None, :]


def build_normalized_adjacency(edge_index, num_nodes):
    """Per-graph dense normalized adjacency (used by the plain-JAX reference)."""
    src = edge_index[0]
    dst = edge_index[1]
    a = jnp.zeros((num_nodes, num_nodes), dtype=jnp.float32)
    a = a.at[dst, src].add(1.0)
    a = a + jnp.eye(num_nodes, dtype=jnp.float32)
    deg = jnp.sum(a, axis=1)
    dinv = jnp.where(deg > 0, 1.0 / jnp.sqrt(deg), 0.0)
    return dinv[:, None] * a * dinv[None, :]


def _pad2(m, rows, cols):
    return jnp.zeros((rows, cols), m.dtype).at[: m.shape[0], : m.shape[1]].set(m)


def _round_up(v, mult):
    return ((v + mult - 1) // mult) * mult


def default_num_splits(batch):
    """2-way chunking on v7x (2 TensorCores/chip); 1 elsewhere (v5e/v6e)."""
    try:
        kind = jax.devices()[0].device_kind.lower().replace(" ", "")
    except Exception:
        return 1
    if ("v7" in kind or "tpu7" in kind) and batch % 2 == 0:
        return 2
    return 1


@functools.partial(jax.jit, static_argnames=("num_splits",))
def gnn_encoder_forward(x_batch, edge_index_batch, params, *, num_splits=1):
    """x_batch: [B, N, F] f32, edge_index_batch: [B, 2, E] int32 -> [B, OUTPUT_DIM]."""
    b, n, f = x_batch.shape
    out_dim = params["w3"].shape[1]
    assert b % num_splits == 0
    gpc = b // num_splits                     # graphs per chunk (per grid step)
    npc = gpc * n                             # real node slots per chunk
    np_pad = _round_up(npc, 128)              # lane-dense padded node count
    group_rows = _round_up(gpc, 8)            # sublane-dense pooled-output rows

    # ---- plain-JAX preprocessing: block-diag adjacency, padding, bf16 casts ----
    a_bd = build_blockdiag_adjacency(edge_index_batch, n)            # [B*N, B*N]
    a_r = a_bd.reshape(num_splits, npc, num_splits, npc)
    idx = jnp.arange(num_splits)
    a_diag = a_r[idx, :, idx, :]                                     # [S, npc, npc]
    a_chunks = (jnp.zeros((num_splits, np_pad, np_pad), jnp.float32)
                .at[:, :npc, :npc].set(a_diag)).astype(jnp.bfloat16)

    x_nodes = x_batch.reshape(num_splits, npc, f).astype(jnp.bfloat16)
    x_chunks = (jnp.zeros((num_splits, np_pad, PAD), jnp.bfloat16)
                .at[:, :npc, :f].set(x_nodes))

    w_stack = jnp.stack([
        _pad2(params["w1"], PAD, PAD),
        _pad2(params["w2"], PAD, PAD),
        _pad2(params["w3"], PAD, PAD),
    ]).astype(jnp.bfloat16)                                          # [3, PAD, PAD]
    b_stack = (jnp.zeros((8, PAD), jnp.float32)                      # rows 0..2 used
               .at[0, :params["b1"].shape[1]].set(params["b1"][0])
               .at[1, :params["b2"].shape[1]].set(params["b2"][0])
               .at[2, :params["b3"].shape[1]].set(params["b3"][0]))

    # Per-graph mean-pool rows (identical for every chunk): row g has 1/N over
    # graph g's node columns; padded rows / padded node slots are zero.
    rows = jnp.arange(group_rows)[:, None]
    cols = jnp.arange(np_pad)[None, :]
    pool_chunk = jnp.where(
        (cols // n == rows) & (rows < gpc) & (cols < npc),
        1.0 / n, 0.0).astype(jnp.bfloat16)                           # [GR, NP]
    pool = jnp.broadcast_to(pool_chunk, (num_splits, group_rows, np_pad))

    grid_spec = pltpu.PrefetchScalarGridSpec(
        num_scalar_prefetch=0,
        grid=(num_splits,),
        in_specs=[
            pl.BlockSpec((None, np_pad, np_pad), lambda s: (s, 0, 0)),    # A chunk
            pl.BlockSpec((None, np_pad, PAD), lambda s: (s, 0, 0)),       # X chunk
            pl.BlockSpec((3, PAD, PAD), lambda s: (0, 0, 0)),             # W1..W3
            pl.BlockSpec((8, PAD), lambda s: (0, 0)),                     # b1..b3
            pl.BlockSpec((None, group_rows, np_pad), lambda s: (s, 0, 0)),  # pool
        ],
        out_specs=pl.BlockSpec((None, group_rows, PAD), lambda s: (s, 0, 0)),
    )

    out = pl.pallas_call(
        gcn_encoder_kernel,
        out_shape=jax.ShapeDtypeStruct((num_splits, group_rows, PAD), jnp.float32),
        grid_spec=grid_spec,
        compiler_params=pltpu.CompilerParams(
            dimension_semantics=("parallel",)),   # chunks are independent graphs
    )(a_chunks, x_chunks, w_stack, b_stack, pool)

    # Strip sublane/lane padding -> [B, OUT]; graph order is chunk-major = original.
    return out[:, :gpc, :out_dim].reshape(b, out_dim)


def init_params(key, num_features, hidden_dim, output_dim):
    """Glorot-uniform init matching GCNConv weight shapes [in, out], zero biases."""
    k1, k2, k3 = jax.random.split(key, 3)

    def glorot(k, fan_in, fan_out):
        scale = jnp.sqrt(6.0 / (fan_in + fan_out))
        return jax.random.uniform(k, (fan_in, fan_out), jnp.float32, -scale, scale)

    return {
        "w1": glorot(k1, num_features, hidden_dim),
        "b1": jnp.zeros((1, hidden_dim), jnp.float32),
        "w2": glorot(k2, hidden_dim, hidden_dim),
        "b2": jnp.zeros((1, hidden_dim), jnp.float32),
        "w3": glorot(k3, hidden_dim, output_dim),
        "b3": jnp.zeros((1, output_dim), jnp.float32),
    }


if __name__ == "__main__":
    key = jax.random.PRNGKey(0)
    kx, ke, kp = jax.random.split(key, 3)

    # B independent graphs, each with N nodes / F features / E directed edges.
    x_batch = jax.random.normal(
        kx, (NUM_GRAPHS, NUM_NODES, NUM_FEATURES), dtype=jnp.float32)
    edge_index_batch = jax.random.randint(
        ke, (NUM_GRAPHS, 2, NUM_EDGES), 0, NUM_NODES, dtype=jnp.int32)

    params = init_params(kp, NUM_FEATURES, HIDDEN_DIM, OUTPUT_DIM)

    num_splits = default_num_splits(NUM_GRAPHS)
    out = gnn_encoder_forward(x_batch, edge_index_batch, params,
                              num_splits=num_splits)
    out = jax.block_until_ready(out)
    assert out.shape == (NUM_GRAPHS, OUTPUT_DIM)

    # Plain-JAX f32 reference of the original module semantics (per graph).
    def ref_one(xg, eig):
        a = build_normalized_adjacency(eig, NUM_NODES)
        h = jnp.maximum(a @ (xg @ params["w1"]) + params["b1"], 0.0)
        h = jnp.maximum(a @ (h @ params["w2"]) + params["b2"], 0.0)
        h = jnp.maximum(a @ (h @ params["w3"]) + params["b3"], 0.0)
        return jnp.mean(h, axis=0)

    ref = jax.vmap(ref_one)(x_batch, edge_index_batch)

    # Kernel feeds the MXU bf16 inputs (f32 accumulation) -> bf16-level tolerance.
    max_err = float(jnp.max(jnp.abs(out - ref)))
    assert jnp.allclose(out, ref, atol=5e-2, rtol=5e-2), max_err

    print("KERNEL_OK")
</pallas_src>

<mosaic_0001>
module attributes {stable_mosaic.version = 11 : i64} {
  func.func @gcn_encoder_kernel(%arg0: i32, %arg1: memref<1x128x128xbf16, #tpu.memory_space<vmem>>, %arg2: memref<1x128x128xbf16, #tpu.memory_space<vmem>>, %arg3: memref<3x128x128xbf16, #tpu.memory_space<vmem>>, %arg4: memref<8x128xf32, #tpu.memory_space<vmem>>, %arg5: memref<1x8x128xbf16, #tpu.memory_space<vmem>>, %arg6: memref<1x8x128xf32, #tpu.memory_space<vmem>>) attributes {dimension_semantics = [#tpu.dimension_semantics<parallel>], iteration_bounds = array<i64: 1>, scalar_prefetch = 0 : i64, scratch_operands = 0 : i64, tpu.core_type = #tpu.core_type<tc>, window_params = [{transform_indices = @transform_0, window_bounds = array<i64: 1, 128, 128>}, {transform_indices = @transform_1, window_bounds = array<i64: 1, 128, 128>}, {pipeline_mode = #tpu.pipeline_mode<synchronous>, transform_indices = @transform_2, window_bounds = array<i64: 3, 128, 128>}, {pipeline_mode = #tpu.pipeline_mode<synchronous>, transform_indices = @transform_3, window_bounds = array<i64: 8, 128>}, {transform_indices = @transform_4, window_bounds = array<i64: 1, 8, 128>}, {transform_indices = @transform_5, window_bounds = array<i64: 1, 8, 128>}]} {
    %c0 = arith.constant 0 : index
    %c0_0 = arith.constant 0 : index
    %c0_1 = arith.constant 0 : index
    %0 = vector.load %arg1[%c0, %c0_0, %c0_1] : memref<1x128x128xbf16, #tpu.memory_space<vmem>>, vector<1x128x128xbf16>
    %1 = vector.shape_cast %0 : vector<1x128x128xbf16> to vector<128x128xbf16>
    %c0_2 = arith.constant 0 : index
    %c0_3 = arith.constant 0 : index
    %c0_4 = arith.constant 0 : index
    %2 = vector.load %arg2[%c0_2, %c0_3, %c0_4] : memref<1x128x128xbf16, #tpu.memory_space<vmem>>, vector<1x128x128xbf16>
    %3 = vector.shape_cast %2 : vector<1x128x128xbf16> to vector<128x128xbf16>
    %c0_5 = arith.constant 0 : index
    %c0_6 = arith.constant 0 : index
    %4 = vector.load %arg4[%c0_5, %c0_6] : memref<8x128xf32, #tpu.memory_space<vmem>>, vector<8x128xf32>
    %c0_7 = arith.constant 0 : index
    %c0_8 = arith.constant 0 : index
    %c0_9 = arith.constant 0 : index
    %5 = vector.load %arg3[%c0_7, %c0_8, %c0_9] : memref<3x128x128xbf16, #tpu.memory_space<vmem>>, vector<1x128x128xbf16>
    %6 = vector.shape_cast %5 : vector<1x128x128xbf16> to vector<128x128xbf16>
    %cst = arith.constant dense<0.000000e+00> : vector<128x128xf32>
    %7 = tpu.matmul %3, %6, %cst {dimension_numbers = #tpu.dot_dimension_numbers<[1], [0], [0], [1], [0, 0, 1, 1], [], []>} : vector<128x128xbf16>, vector<128x128xbf16>, vector<128x128xf32> -> vector<128x128xf32>
    %8 = arith.truncf %7 : vector<128x128xf32> to vector<128x128xbf16>
    %cst_10 = arith.constant dense<0.000000e+00> : vector<128x128xf32>
    %9 = tpu.matmul %1, %8, %cst_10 {dimension_numbers = #tpu.dot_dimension_numbers<[1], [0], [0], [1], [0, 0, 1, 1], [], []>} : vector<128x128xbf16>, vector<128x128xbf16>, vector<128x128xf32> -> vector<128x128xf32>
    %10 = vector.extract_strided_slice %4 {offsets = [0, 0], sizes = [1, 128], strides = [1, 1]} : vector<8x128xf32> to vector<1x128xf32>
    %11 = vector.broadcast %10 : vector<1x128xf32> to vector<128x128xf32>
    %12 = arith.addf %9, %11 : vector<128x128xf32>
    %cst_11 = arith.constant 0.000000e+00 : f32
    %13 = vector.broadcast %cst_11 : f32 to vector<128x128xf32>
    %14 = arith.maximumf %12, %13 : vector<128x128xf32>
    %15 = arith.truncf %14 : vector<128x128xf32> to vector<128x128xbf16>
    %c1 = arith.constant 1 : index
    %c0_12 = arith.constant 0 : index
    %c0_13 = arith.constant 0 : index
    %16 = vector.load %arg3[%c1, %c0_12, %c0_13] : memref<3x128x128xbf16, #tpu.memory_space<vmem>>, vector<1x128x128xbf16>
    %17 = vector.shape_cast %16 : vector<1x128x128xbf16> to vector<128x128xbf16>
    %cst_14 = arith.constant dense<0.000000e+00> : vector<128x128xf32>
    %18 = tpu.matmul %15, %17, %cst_14 {dimension_numbers = #tpu.dot_dimension_numbers<[1], [0], [0], [1], [0, 0, 1, 1], [], []>} : vector<128x128xbf16>, vector<128x128xbf16>, vector<128x128xf32> -> vector<128x128xf32>
    %19 = arith.truncf %18 : vector<128x128xf32> to vector<128x128xbf16>
    %cst_15 = arith.constant dense<0.000000e+00> : vector<128x128xf32>
    %20 = tpu.matmul %1, %19, %cst_15 {dimension_numbers = #tpu.dot_dimension_numbers<[1], [0], [0], [1], [0, 0, 1, 1], [], []>} : vector<128x128xbf16>, vector<128x128xbf16>, vector<128x128xf32> -> vector<128x128xf32>
    %21 = vector.extract_strided_slice %4 {offsets = [1, 0], sizes = [1, 128], strides = [1, 1]} : vector<8x128xf32> to vector<1x128xf32>
    %22 = vector.broadcast %21 : vector<1x128xf32> to vector<128x128xf32>
    %23 = arith.addf %20, %22 : vector<128x128xf32>
    %cst_16 = arith.constant 0.000000e+00 : f32
    %24 = vector.broadcast %cst_16 : f32 to vector<128x128xf32>
    %25 = arith.maximumf %23, %24 : vector<128x128xf32>
    %26 = arith.truncf %25 : vector<128x128xf32> to vector<128x128xbf16>
    %c2 = arith.constant 2 : index
    %c0_17 = arith.constant 0 : index
    %c0_18 = arith.constant 0 : index
    %27 = vector.load %arg3[%c2, %c0_17, %c0_18] : memref<3x128x128xbf16, #tpu.memory_space<vmem>>, vector<1x128x128xbf16>
    %28 = vector.shape_cast %27 : vector<1x128x128xbf16> to vector<128x128xbf16>
    %cst_19 = arith.constant dense<0.000000e+00> : vector<128x128xf32>
    %29 = tpu.matmul %26, %28, %cst_19 {dimension_numbers = #tpu.dot_dimension_numbers<[1], [0], [0], [1], [0, 0, 1, 1], [], []>} : vector<128x128xbf16>, vector<128x128xbf16>, vector<128x128xf32> -> vector<128x128xf32>
    %30 = arith.truncf %29 : vector<128x128xf32> to vector<128x128xbf16>
    %cst_20 = arith.constant dense<0.000000e+00> : vector<128x128xf32>
    %31 = tpu.matmul %1, %30, %cst_20 {dimension_numbers = #tpu.dot_dimension_numbers<[1], [0], [0], [1], [0, 0, 1, 1], [], []>} : vector<128x128xbf16>, vector<128x128xbf16>, vector<128x128xf32> -> vector<128x128xf32>
    %32 = vector.extract_strided_slice %4 {offsets = [2, 0], sizes = [1, 128], strides = [1, 1]} : vector<8x128xf32> to vector<1x128xf32>
    %33 = vector.broadcast %32 : vector<1x128xf32> to vector<128x128xf32>
    %34 = arith.addf %31, %33 : vector<128x128xf32>
    %cst_21 = arith.constant 0.000000e+00 : f32
    %35 = vector.broadcast %cst_21 : f32 to vector<128x128xf32>
    %36 = arith.maximumf %34, %35 : vector<128x128xf32>
    %37 = arith.truncf %36 : vector<128x128xf32> to vector<128x128xbf16>
    %c0_22 = arith.constant 0 : index
    %c0_23 = arith.constant 0 : index
    %c0_24 = arith.constant 0 : index
    %38 = vector.load %arg5[%c0_22, %c0_23, %c0_24] : memref<1x8x128xbf16, #tpu.memory_space<vmem>>, vector<1x8x128xbf16>
    %39 = vector.shape_cast %38 : vector<1x8x128xbf16> to vector<8x128xbf16>
    %cst_25 = arith.constant dense<0.000000e+00> : vector<8x128xf32>
    %40 = tpu.matmul %39, %37, %cst_25 {dimension_numbers = #tpu.dot_dimension_numbers<[1], [0], [0], [1], [0, 0, 1, 1], [], []>} : vector<8x128xbf16>, vector<128x128xbf16>, vector<8x128xf32> -> vector<8x128xf32>
    %c0_26 = arith.constant 0 : index
    %c0_27 = arith.constant 0 : index
    %c0_28 = arith.constant 0 : index
    %41 = vector.load %arg6[%c0_26, %c0_27, %c0_28] : memref<1x8x128xf32, #tpu.memory_space<vmem>>, vector<1x8x128xf32>
    %42 = vector.shape_cast %41 : vector<1x8x128xf32> to vector<8x128xf32>
    %43 = vector.shape_cast %40 : vector<8x128xf32> to vector<1x8x128xf32>
    tpu.vector_store %arg6[%c0_26, %c0_27, %c0_28], %43 {strides = array<i32>} : memref<1x8x128xf32, #tpu.memory_space<vmem>>, vector<1x8x128xf32>,
    return
  }
  func.func @transform_0(%arg0: i32) -> (i32, i32, i32) {
    %c0_i32 = arith.constant 0 : i32
    %c0_i32_0 = arith.constant 0 : i32
    %c0_i32_1 = arith.constant 0 : i32
    return %arg0, %c0_i32, %c0_i32_0 : i32, i32, i32
  }
  func.func @transform_1(%arg0: i32) -> (i32, i32, i32) {
    %c0_i32 = arith.constant 0 : i32
    %c0_i32_0 = arith.constant 0 : i32
    %c0_i32_1 = arith.constant 0 : i32
    return %arg0, %c0_i32, %c0_i32_0 : i32, i32, i32
  }
  func.func @transform_2(%arg0: i32) -> (i32, i32, i32) {
    %c0_i32 = arith.constant 0 : i32
    %c0_i32_0 = arith.constant 0 : i32
    %c0_i32_1 = arith.constant 0 : i32
    %c0_i32_2 = arith.constant 0 : i32
    return %c0_i32, %c0_i32_0, %c0_i32_1 : i32, i32, i32
  }
  func.func @transform_3(%arg0: i32) -> (i32, i32) {
    %c0_i32 = arith.constant 0 : i32
    %c0_i32_0 = arith.constant 0 : i32
    %c0_i32_1 = arith.constant 0 : i32
    return %c0_i32, %c0_i32_0 : i32, i32
  }
  func.func @transform_4(%arg0: i32) -> (i32, i32, i32) {
    %c0_i32 = arith.constant 0 : i32
    %c0_i32_0 = arith.constant 0 : i32
    %c0_i32_1 = arith.constant 0 : i32
    return %arg0, %c0_i32, %c0_i32_0 : i32, i32, i32
  }
  func.func @transform_5(%arg0: i32) -> (i32, i32, i32) {
    %c0_i32 = arith.constant 0 : i32
    %c0_i32_0 = arith.constant 0 : i32
    %c0_i32_1 = arith.constant 0 : i32
    return %arg0, %c0_i32, %c0_i32_0 : i32, i32, i32
  }
}

</mosaic_0001>

<llo_original>
// kernel: gnn_encoder_forward.1
$region0: #{gnn_encoder_forward.1}
  #allocation0 [shape = 'u32[]', space=smem, size = 0x4, offset = 0x4, fixed_abs, tag = 'smem constant byte address 0x4 - core index']
  #allocation1 [shape = 'u32[72,128]{1,0:T(1,128)}', space=vmem, size = 0x9000, scoped, tag = 'internal scratch']
  %s0 = inlined_call_operand.vmem [shape: bf16[1,128,128], index: 0, kind: input, shape index: {}]
  %s1 = inlined_call_operand.vmem [shape: bf16[1,128,128], index: 1, kind: input, shape index: {}]
  %s2 = inlined_call_operand.vmem [shape: bf16[3,128,128], index: 2, kind: input, shape index: {}]
  %s3 = inlined_call_operand.vmem [shape: f32[8,128], index: 3, kind: input, shape index: {}]
  %s4 = inlined_call_operand.vmem [shape: bf16[1,8,128], index: 4, kind: input, shape index: {}]
  %s5 = inlined_call_operand.vmem [shape: f32[1,8,128], index: 5, kind: output, shape index: {}]
  %s6 = sld [smem:[#allocation0]]
  $region30: #{gnn_encoder_forward.1} parent=0
    _
  %s8 = ssub.s32 1, %s6
  %s9 = scalar_select 0, %s8, %s6
  // Predicated region
  $region2: #{gnn_encoder_forward.1} parent=0 // pred_check
    _
  $region3: #{gnn_encoder_forward.1} parent=0 // pred_check_branch
    %11 = sbr.rel (0) target = $region5
  $region4: #{gnn_encoder_forward.1} parent=0 // pred_region
    _
  $region5: #{gnn_encoder_forward.1} parent=0 // pred_fallthru
    _
  // Predicated region
  $region6: #{gnn_encoder_forward.1} parent=0 // pred_check
    _
  $region7: #{gnn_encoder_forward.1} parent=0 // pred_check_branch
    %13 = sbr.rel (0) target = $region9
  $region8: #{gnn_encoder_forward.1} parent=0 // pred_region
    _
  $region9: #{gnn_encoder_forward.1} parent=0 // pred_fallthru
    _
  // Predicated region
  $region10: #{gnn_encoder_forward.1} parent=0 // pred_check
    _
  $region11: #{gnn_encoder_forward.1} parent=0 // pred_check_branch
    %15 = sbr.rel (0) target = $region13
  $region12: #{gnn_encoder_forward.1} parent=0 // pred_region
    _
  $region13: #{gnn_encoder_forward.1} parent=0 // pred_fallthru
    _
  // Predicated region
  $region14: #{gnn_encoder_forward.1} parent=0 // pred_check
    _
  $region15: #{gnn_encoder_forward.1} parent=0 // pred_check_branch
    %17 = sbr.rel (0) target = $region17
  $region16: #{gnn_encoder_forward.1} parent=0 // pred_region
    _
  $region17: #{gnn_encoder_forward.1} parent=0 // pred_fallthru
    _
  // Predicated region
  $region18: #{gnn_encoder_forward.1} parent=0 // pred_check
    _
  $region19: #{gnn_encoder_forward.1} parent=0 // pred_check_branch
    %19 = sbr.rel (0) target = $region21
  $region20: #{gnn_encoder_forward.1} parent=0 // pred_region
    _
  $region21: #{gnn_encoder_forward.1} parent=0 // pred_fallthru
    _
  %v20 = vld [vmem:[%s0] sm:$0xf]
  %v21 = vld [vmem:[%s0 + $0x4] sm:$0xf]
  %v22 = vld [vmem:[%s0 + $0x8] sm:$0xf]
  %v23 = vld [vmem:[%s0 + $0xc] sm:$0xf]
  %v24 = vld [vmem:[%s0 + $0x10] sm:$0xf]
  %v25 = vld [vmem:[%s0 + $0x14] sm:$0xf]
  %v26 = vld [vmem:[%s0 + $0x18] sm:$0xf]
  %v27 = vld [vmem:[%s0 + $0x1c] sm:$0xf]
  %v28 = vld [vmem:[%s0 + $0x20] sm:$0xf]
  %v29 = vld [vmem:[%s0 + $0x24] sm:$0xf]
  %v30 = vld [vmem:[%s0 + $0x28] sm:$0xf]
  %v31 = vld [vmem:[%s0 + $0x2c] sm:$0xf]
  %v32 = vld [vmem:[%s0 + $0x30] sm:$0xf]
  %v33 = vld [vmem:[%s0 + $0x34] sm:$0xf]
  %v34 = vld [vmem:[%s0 + $0x38] sm:$0xf]
  %v35 = vld [vmem:[%s0 + $0x3c] sm:$0xf]
  %v36 = vld [vmem:[%s1] sm:$0xf]
  %v37 = vld [vmem:[%s1 + $0x4] sm:$0xf]
  %v38 = vld [vmem:[%s1 + $0x8] sm:$0xf]
  %v39 = vld [vmem:[%s1 + $0xc] sm:$0xf]
  %v40 = vld [vmem:[%s1 + $0x10] sm:$0xf]
  %v41 = vld [vmem:[%s1 + $0x14] sm:$0xf]
  %v42 = vld [vmem:[%s1 + $0x18] sm:$0xf]
  %v43 = vld [vmem:[%s1 + $0x1c] sm:$0xf]
  %v44 = vld [vmem:[%s1 + $0x20] sm:$0xf]
  %v45 = vld [vmem:[%s1 + $0x24] sm:$0xf]
  %v46 = vld [vmem:[%s1 + $0x28] sm:$0xf]
  %v47 = vld [vmem:[%s1 + $0x2c] sm:$0xf]
  %v48 = vld [vmem:[%s1 + $0x30] sm:$0xf]
  %v49 = vld [vmem:[%s1 + $0x34] sm:$0xf]
  %v50 = vld [vmem:[%s1 + $0x38] sm:$0xf]
  %v51 = vld [vmem:[%s1 + $0x3c] sm:$0xf]
  %v52 = vld [vmem:[%s3] sm:$0xff]
  %v53 = vld [vmem:[%s2] sm:$0xf]
  %v54 = vld [vmem:[%s2 + $0x4] sm:$0xf]
  %v55 = vld [vmem:[%s2 + $0x8] sm:$0xf]
  %v56 = vld [vmem:[%s2 + $0xc] sm:$0xf]
  %v57 = vld [vmem:[%s2 + $0x10] sm:$0xf]
  %v58 = vld [vmem:[%s2 + $0x14] sm:$0xf]
  %v59 = vld [vmem:[%s2 + $0x18] sm:$0xf]
  %v60 = vld [vmem:[%s2 + $0x1c] sm:$0xf]
  %v61 = vld [vmem:[%s2 + $0x20] sm:$0xf]
  %v62 = vld [vmem:[%s2 + $0x24] sm:$0xf]
  %v63 = vld [vmem:[%s2 + $0x28] sm:$0xf]
  %v64 = vld [vmem:[%s2 + $0x2c] sm:$0xf]
  %v65 = vld [vmem:[%s2 + $0x30] sm:$0xf]
  %v66 = vld [vmem:[%s2 + $0x34] sm:$0xf]
  %v67 = vld [vmem:[%s2 + $0x38] sm:$0xf]
  %v68 = vld [vmem:[%s2 + $0x3c] sm:$0xf]
  %v85 = vunpack.c.l.b16 %v36
  %v86 = vunpack.c.l.b16 %v37
  %v87 = vunpack.c.l.b16 %v38
  %v88 = vunpack.c.l.b16 %v39
  %v89 = vunpack.c.l.b16 %v40
  %v90 = vunpack.c.l.b16 %v41
  %v91 = vunpack.c.l.b16 %v42
  %v92 = vunpack.c.l.b16 %v43
  %v93 = vunpack.c.l.b16 %v44
  %v94 = vunpack.c.l.b16 %v45
  %v95 = vunpack.c.l.b16 %v46
  %v96 = vunpack.c.l.b16 %v47
  %v97 = vunpack.c.l.b16 %v48
  %v98 = vunpack.c.l.b16 %v49
  %v99 = vunpack.c.l.b16 %v50
  %v100 = vunpack.c.l.b16 %v51
  %v101 = vpack.c.b16 %v86, %v85
  %v102 = vpack.c.b16 %v88, %v87
  %v103 = vpack.c.b16 %v90, %v89
  %v104 = vpack.c.b16 %v92, %v91
  %v105 = vpack.c.b16 %v94, %v93
  %v106 = vpack.c.b16 %v96, %v95
  %v107 = vpack.c.b16 %v98, %v97
  %v108 = vpack.c.b16 %v100, %v99
  %v133 = vunpack.c.l.b16 %v53
  %v134 = vunpack.c.l.b16 %v54
  %v135 = vunpack.c.l.b16 %v55
  %v136 = vunpack.c.l.b16 %v56
  %v137 = vunpack.c.l.b16 %v57
  %v138 = vunpack.c.l.b16 %v58
  %v139 = vunpack.c.l.b16 %v59
  %v140 = vunpack.c.l.b16 %v60
  %v141 = vunpack.c.l.b16 %v61
  %v142 = vunpack.c.l.b16 %v62
  %v143 = vunpack.c.l.b16 %v63
  %v144 = vunpack.c.l.b16 %v64
  %v145 = vunpack.c.l.b16 %v65
  %v146 = vunpack.c.l.b16 %v66
  %v147 = vunpack.c.l.b16 %v67
  %v148 = vunpack.c.l.b16 %v68
  %v149 = vpack.c.b16 %v134, %v133
  %v150 = vpack.c.b16 %v136, %v135
  %v151 = vpack.c.b16 %v138, %v137
  %v152 = vpack.c.b16 %v140, %v139
  %v153 = vpack.c.b16 %v142, %v141
  %v154 = vpack.c.b16 %v144, %v143
  %v155 = vpack.c.b16 %v146, %v145
  %v156 = vpack.c.b16 %v148, %v147
  %165 = vmatpush.bf16.msra.mxu0 %v156
  %166 = vmatpush.bf16.msra.mxu0 %v155
  %167 = vmatpush.bf16.msra.mxu0 %v154
  %168 = vmatpush.bf16.msra.mxu0 %v153
  %169 = vmatpush.bf16.msra.mxu0 %v152
  %170 = vmatpush.bf16.msra.mxu0 %v151
  %171 = vmatpush.bf16.msra.mxu0 %v150
  %172 = vmatpush.bf16.msra.mxu0 %v149
  %173 = vmatmul.bf16.gmra.mxu0 %v101
  %v174 = vpop.f32.mrf.mxu0
  %v175 = vadd.f32 0.0, %v174
  %v176 = vpop.f32.mrf.mxu0
  %v177 = vadd.f32 0.0, %v176
  %178 = vmatmul.bf16.gmra.mxu0 %v102
  %v179 = vpop.f32.mrf.mxu0
  %v180 = vadd.f32 0.0, %v179
  %v181 = vpop.f32.mrf.mxu0
  %v182 = vadd.f32 0.0, %v181
  %183 = vmatmul.bf16.gmra.mxu0 %v103
  %v184 = vpop.f32.mrf.mxu0
  %v185 = vadd.f32 0.0, %v184
  %v186 = vpop.f32.mrf.mxu0
  %v187 = vadd.f32 0.0, %v186
  %188 = vmatmul.bf16.gmra.mxu0 %v104
  %v189 = vpop.f32.mrf.mxu0
  %v190 = vadd.f32 0.0, %v189
  %v191 = vpop.f32.mrf.mxu0
  %v192 = vadd.f32 0.0, %v191
  %193 = vmatmul.bf16.gmra.mxu0 %v105
  %v194 = vpop.f32.mrf.mxu0
  %v195 = vadd.f32 0.0, %v194
  %v196 = vpop.f32.mrf.mxu0
  %v197 = vadd.f32 0.0, %v196
  %198 = vmatmul.bf16.gmra.mxu0 %v106
  %v199 = vpop.f32.mrf.mxu0
  %v200 = vadd.f32 0.0, %v199
  %v201 = vpop.f32.mrf.mxu0
  %v202 = vadd.f32 0.0, %v201
  %203 = vmatmul.bf16.gmra.mxu0 %v107
  %v204 = vpop.f32.mrf.mxu0
  %v205 = vadd.f32 0.0, %v204
  %v206 = vpop.f32.mrf.mxu0
  %v207 = vadd.f32 0.0, %v206
  %208 = vmatmul.bf16.gmra.mxu0 %v108
  %v209 = vpop.f32.mrf.mxu0
  %v210 = vadd.f32 0.0, %v209
  %v211 = vpop.f32.mrf.mxu0
  %v212 = vadd.f32 0.0, %v211
  %213 = vdwg.mxu0
  %v214 = vpack.c.bf16 %v177, %v175
  %v215 = vpack.c.bf16 %v182, %v180
  %v216 = vpack.c.bf16 %v187, %v185
  %v217 = vpack.c.bf16 %v192, %v190
  %v218 = vpack.c.bf16 %v197, %v195
  %v219 = vpack.c.bf16 %v202, %v200
  %v220 = vpack.c.bf16 %v207, %v205
  %v221 = vpack.c.bf16 %v212, %v210
  %v222 = vperm.slane %v52, 0
  %v239 = vunpack.c.l.b16 %v20
  %v240 = vunpack.c.l.b16 %v21
  %v241 = vunpack.c.l.b16 %v22
  %v242 = vunpack.c.l.b16 %v23
  %v243 = vunpack.c.l.b16 %v24
  %v244 = vunpack.c.l.b16 %v25
  %v245 = vunpack.c.l.b16 %v26
  %v246 = vunpack.c.l.b16 %v27
  %v247 = vunpack.c.l.b16 %v28
  %v248 = vunpack.c.l.b16 %v29
  %v249 = vunpack.c.l.b16 %v30
  %v250 = vunpack.c.l.b16 %v31
  %v251 = vunpack.c.l.b16 %v32
  %v252 = vunpack.c.l.b16 %v33
  %v253 = vunpack.c.l.b16 %v34
  %v254 = vunpack.c.l.b16 %v35
  %v255 = vpack.c.b16 %v240, %v239
  %v256 = vpack.c.b16 %v242, %v241
  %v257 = vpack.c.b16 %v244, %v243
  %v258 = vpack.c.b16 %v246, %v245
  %v259 = vpack.c.b16 %v248, %v247
  %v260 = vpack.c.b16 %v250, %v249
  %v261 = vpack.c.b16 %v252, %v251
  %v262 = vpack.c.b16 %v254, %v253
  %271 = vmatpush.bf16.msra.mxu0 %v221
  %272 = vmatpush.bf16.msra.mxu0 %v220
  %273 = vmatpush.bf16.msra.mxu0 %v219
  %274 = vmatpush.bf16.msra.mxu0 %v218
  %275 = vmatpush.bf16.msra.mxu0 %v217
  %276 = vmatpush.bf16.msra.mxu0 %v216
  %277 = vmatpush.bf16.msra.mxu0 %v215
  %278 = vmatpush.bf16.msra.mxu0 %v214
  %279 = vmatmul.bf16.gmra.mxu0 %v255
  %v280 = vpop.f32.mrf.mxu0
  %v281 = vadd.f32 %v222, %v280
  %v282 = vpop.f32.mrf.mxu0
  %v283 = vadd.f32 %v222, %v282
  %284 = vmatmul.bf16.gmra.mxu0 %v256
  %v285 = vpop.f32.mrf.mxu0
  %v286 = vadd.f32 %v222, %v285
  %v287 = vpop.f32.mrf.mxu0
  %v288 = vadd.f32 %v222, %v287
  %289 = vmatmul.bf16.gmra.mxu0 %v257
  %v290 = vpop.f32.mrf.mxu0
  %v291 = vadd.f32 %v222, %v290
  %v292 = vpop.f32.mrf.mxu0
  %v293 = vadd.f32 %v222, %v292
  %294 = vmatmul.bf16.gmra.mxu0 %v258
  %v295 = vpop.f32.mrf.mxu0
  %v296 = vadd.f32 %v222, %v295
  %v297 = vpop.f32.mrf.mxu0
  %v298 = vadd.f32 %v222, %v297
  %299 = vmatmul.bf16.gmra.mxu0 %v259
  %v300 = vpop.f32.mrf.mxu0
  %v301 = vadd.f32 %v222, %v300
  %v302 = vpop.f32.mrf.mxu0
  %v303 = vadd.f32 %v222, %v302
  %304 = vmatmul.bf16.gmra.mxu0 %v260
  %v305 = vpop.f32.mrf.mxu0
  %v306 = vadd.f32 %v222, %v305
  %v307 = vpop.f32.mrf.mxu0
  %v308 = vadd.f32 %v222, %v307
  %309 = vmatmul.bf16.gmra.mxu0 %v261
  %v310 = vpop.f32.mrf.mxu0
  %v311 = vadd.f32 %v222, %v310
  %v312 = vpop.f32.mrf.mxu0
  %v313 = vadd.f32 %v222, %v312
  %314 = vmatmul.bf16.gmra.mxu0 %v262
  %v315 = vpop.f32.mrf.mxu0
  %v316 = vadd.f32 %v222, %v315
  %v317 = vpop.f32.mrf.mxu0
  %v318 = vadd.f32 %v222, %v317
  %319 = vdwg.mxu0
  %v320 = vmax.f32 %v281, 0.0
  %v321 = vmax.f32 %v283, 0.0
  %v322 = vmax.f32 %v286, 0.0
  %v323 = vmax.f32 %v288, 0.0
  %v324 = vmax.f32 %v291, 0.0
  %v325 = vmax.f32 %v293, 0.0
  %v326 = vmax.f32 %v296, 0.0
  %v327 = vmax.f32 %v298, 0.0
  %v328 = vmax.f32 %v301, 0.0
  %v329 = vmax.f32 %v303, 0.0
  %v330 = vmax.f32 %v306, 0.0
  %v331 = vmax.f32 %v308, 0.0
  %v332 = vmax.f32 %v311, 0.0
  %v333 = vmax.f32 %v313, 0.0
  %v334 = vmax.f32 %v316, 0.0
  %v335 = vmax.f32 %v318, 0.0
  %v336 = vpack.c.bf16 %v321, %v320
  %v337 = vpack.c.bf16 %v323, %v322
  %v338 = vpack.c.bf16 %v325, %v324
  %v339 = vpack.c.bf16 %v327, %v326
  %v340 = vpack.c.bf16 %v329, %v328
  %v341 = vpack.c.bf16 %v331, %v330
  %v342 = vpack.c.bf16 %v333, %v332
  %v343 = vpack.c.bf16 %v335, %v334
  %s344 = scalar_lea.vmem %s2, 64
  %v345 = vld [vmem:[%s344] sm:$0xf]
  %v346 = vld [vmem:[%s344 + $0x4] sm:$0xf]
  %v347 = vld [vmem:[%s344 + $0x8] sm:$0xf]
  %v348 = vld [vmem:[%s344 + $0xc] sm:$0xf]
  %v349 = vld [vmem:[%s344 + $0x10] sm:$0xf]
  %v350 = vld [vmem:[%s344 + $0x14] sm:$0xf]
  %v351 = vld [vmem:[%s344 + $0x18] sm:$0xf]
  %v352 = vld [vmem:[%s344 + $0x1c] sm:$0xf]
  %v353 = vld [vmem:[%s344 + $0x20] sm:$0xf]
  %v354 = vld [vmem:[%s344 + $0x24] sm:$0xf]
  %v355 = vld [vmem:[%s344 + $0x28] sm:$0xf]
  %v356 = vld [vmem:[%s344 + $0x2c] sm:$0xf]
  %v357 = vld [vmem:[%s344 + $0x30] sm:$0xf]
  %v358 = vld [vmem:[%s344 + $0x34] sm:$0xf]
  %v359 = vld [vmem:[%s344 + $0x38] sm:$0xf]
  %v360 = vld [vmem:[%s344 + $0x3c] sm:$0xf]
  %v377 = vunpack.c.l.b16 %v345
  %v378 = vunpack.c.l.b16 %v346
  %v379 = vunpack.c.l.b16 %v347
  %v380 = vunpack.c.l.b16 %v348
  %v381 = vunpack.c.l.b16 %v349
  %v382 = vunpack.c.l.b16 %v350
  %v383 = vunpack.c.l.b16 %v351
  %v384 = vunpack.c.l.b16 %v352
  %v385 = vunpack.c.l.b16 %v353
  %v386 = vunpack.c.l.b16 %v354
  %v387 = vunpack.c.l.b16 %v355
  %v388 = vunpack.c.l.b16 %v356
  %v389 = vunpack.c.l.b16 %v357
  %v390 = vunpack.c.l.b16 %v358
  %v391 = vunpack.c.l.b16 %v359
  %v392 = vunpack.c.l.b16 %v360
  %v393 = vpack.c.b16 %v378, %v377
  %v394 = vpack.c.b16 %v380, %v379
  %v395 = vpack.c.b16 %v382, %v381
  %v396 = vpack.c.b16 %v384, %v383
  %v397 = vpack.c.b16 %v386, %v385
  %v398 = vpack.c.b16 %v388, %v387
  %v399 = vpack.c.b16 %v390, %v389
  %v400 = vpack.c.b16 %v392, %v391
  %409 = vmatpush.bf16.msra.mxu0 %v400
  %410 = vmatpush.bf16.msra.mxu0 %v399
  %411 = vmatpush.bf16.msra.mxu0 %v398
  %412 = vmatpush.bf16.msra.mxu0 %v397
  %413 = vmatpush.bf16.msra.mxu0 %v396
  %414 = vmatpush.bf16.msra.mxu0 %v395
  %415 = vmatpush.bf16.msra.mxu0 %v394
  %416 = vmatpush.bf16.msra.mxu0 %v393
  %417 = vmatmul.bf16.gmra.mxu0 %v336
  %v418 = vpop.f32.mrf.mxu0
  %v419 = vadd.f32 0.0, %v418
  %v420 = vpop.f32.mrf.mxu0
  %v421 = vadd.f32 0.0, %v420
  %422 = vmatmul.bf16.gmra.mxu0 %v337
  %v423 = vpop.f32.mrf.mxu0
  %v424 = vadd.f32 0.0, %v423
  %v425 = vpop.f32.mrf.mxu0
  %v426 = vadd.f32 0.0, %v425
  %427 = vmatmul.bf16.gmra.mxu0 %v338
  %v428 = vpop.f32.mrf.mxu0
  %v429 = vadd.f32 0.0, %v428
  %v430 = vpop.f32.mrf.mxu0
  %v431 = vadd.f32 0.0, %v430
  %432 = vmatmul.bf16.gmra.mxu0 %v339
  %v433 = vpop.f32.mrf.mxu0
  %v434 = vadd.f32 0.0, %v433
  %v435 = vpop.f32.mrf.mxu0
  %v436 = vadd.f32 0.0, %v435
  %437 = vmatmul.bf16.gmra.mxu0 %v340
  %v438 = vpop.f32.mrf.mxu0
  %v439 = vadd.f32 0.0, %v438
  %v440 = vpop.f32.mrf.mxu0
  %v441 = vadd.f32 0.0, %v440
  %442 = vmatmul.bf16.gmra.mxu0 %v341
  %v443 = vpop.f32.mrf.mxu0
  %v444 = vadd.f32 0.0, %v443
  %v445 = vpop.f32.mrf.mxu0
  %v446 = vadd.f32 0.0, %v445
  %447 = vmatmul.bf16.gmra.mxu0 %v342
  %v448 = vpop.f32.mrf.mxu0
  %v449 = vadd.f32 0.0, %v448
  %v450 = vpop.f32.mrf.mxu0
  %v451 = vadd.f32 0.0, %v450
  %452 = vmatmul.bf16.gmra.mxu0 %v343
  %v453 = vpop.f32.mrf.mxu0
  %v454 = vadd.f32 0.0, %v453
  %v455 = vpop.f32.mrf.mxu0
  %v456 = vadd.f32 0.0, %v455
  %457 = vdwg.mxu0
  %v458 = vpack.c.bf16 %v421, %v419
  %v459 = vpack.c.bf16 %v426, %v424
  %v460 = vpack.c.bf16 %v431, %v429
  %v461 = vpack.c.bf16 %v436, %v434
  %v462 = vpack.c.bf16 %v441, %v439
  %v463 = vpack.c.bf16 %v446, %v444
  %v464 = vpack.c.bf16 %v451, %v449
  %v465 = vpack.c.bf16 %v456, %v454
  %v466 = vperm.slane %v52, 1
  %467 = vmatpush.bf16.msra.mxu0 %v465
  %468 = vmatpush.bf16.msra.mxu0 %v464
  %469 = vmatpush.bf16.msra.mxu0 %v463
  %470 = vmatpush.bf16.msra.mxu0 %v462
  %471 = vmatpush.bf16.msra.mxu0 %v461
  %472 = vmatpush.bf16.msra.mxu0 %v460
  %473 = vmatpush.bf16.msra.mxu0 %v459
  %474 = vmatpush.bf16.msra.mxu0 %v458
  %475 = vmatmul.bf16.gmra.mxu0 %v255
  %v476 = vpop.f32.mrf.mxu0
  %v477 = vadd.f32 %v466, %v476
  %v478 = vpop.f32.mrf.mxu0
  %v479 = vadd.f32 %v466, %v478
  %480 = vmatmul.bf16.gmra.mxu0 %v256
  %v481 = vpop.f32.mrf.mxu0
  %v482 = vadd.f32 %v466, %v481
  %v483 = vpop.f32.mrf.mxu0
  %v484 = vadd.f32 %v466, %v483
  %485 = vmatmul.bf16.gmra.mxu0 %v257
  %v486 = vpop.f32.mrf.mxu0
  %v487 = vadd.f32 %v466, %v486
  %v488 = vpop.f32.mrf.mxu0
  %v489 = vadd.f32 %v466, %v488
  %490 = vmatmul.bf16.gmra.mxu0 %v258
  %v491 = vpop.f32.mrf.mxu0
  %v492 = vadd.f32 %v466, %v491
  %v493 = vpop.f32.mrf.mxu0
  %v494 = vadd.f32 %v466, %v493
  %495 = vmatmul.bf16.gmra.mxu0 %v259
  %v496 = vpop.f32.mrf.mxu0
  %v497 = vadd.f32 %v466, %v496
  %v498 = vpop.f32.mrf.mxu0
  %v499 = vadd.f32 %v466, %v498
  %500 = vmatmul.bf16.gmra.mxu0 %v260
  %v501 = vpop.f32.mrf.mxu0
  %v502 = vadd.f32 %v466, %v501
  %v503 = vpop.f32.mrf.mxu0
  %v504 = vadd.f32 %v466, %v503
  %505 = vmatmul.bf16.gmra.mxu0 %v261
  %v506 = vpop.f32.mrf.mxu0
  %v507 = vadd.f32 %v466, %v506
  %v508 = vpop.f32.mrf.mxu0
  %v509 = vadd.f32 %v466, %v508
  %510 = vmatmul.bf16.gmra.mxu0 %v262
  %v511 = vpop.f32.mrf.mxu0
  %v512 = vadd.f32 %v466, %v511
  %v513 = vpop.f32.mrf.mxu0
  %v514 = vadd.f32 %v466, %v513
  %515 = vdwg.mxu0
  %v516 = vmax.f32 %v477, 0.0
  %v517 = vmax.f32 %v479, 0.0
  %v518 = vmax.f32 %v482, 0.0
  %v519 = vmax.f32 %v484, 0.0
  %v520 = vmax.f32 %v487, 0.0
  %v521 = vmax.f32 %v489, 0.0
  %v522 = vmax.f32 %v492, 0.0
  %v523 = vmax.f32 %v494, 0.0
  %v524 = vmax.f32 %v497, 0.0
  %v525 = vmax.f32 %v499, 0.0
  %v526 = vmax.f32 %v502, 0.0
  %v527 = vmax.f32 %v504, 0.0
  %v528 = vmax.f32 %v507, 0.0
  %v529 = vmax.f32 %v509, 0.0
  %v530 = vmax.f32 %v512, 0.0
  %v531 = vmax.f32 %v514, 0.0
  %v532 = vpack.c.bf16 %v517, %v516
  %v533 = vpack.c.bf16 %v519, %v518
  %v534 = vpack.c.bf16 %v521, %v520
  %v535 = vpack.c.bf16 %v523, %v522
  %v536 = vpack.c.bf16 %v525, %v524
  %v537 = vpack.c.bf16 %v527, %v526
  %v538 = vpack.c.bf16 %v529, %v528
  %v539 = vpack.c.bf16 %v531, %v530
  %s540 = scalar_lea.vmem %s2, 128
  %v541 = vld [vmem:[%s540] sm:$0xf]
  %v542 = vld [vmem:[%s540 + $0x4] sm:$0xf]
  %v543 = vld [vmem:[%s540 + $0x8] sm:$0xf]
  %v544 = vld [vmem:[%s540 + $0xc] sm:$0xf]
  %v545 = vld [vmem:[%s540 + $0x10] sm:$0xf]
  %v546 = vld [vmem:[%s540 + $0x14] sm:$0xf]
  %v547 = vld [vmem:[%s540 + $0x18] sm:$0xf]
  %v548 = vld [vmem:[%s540 + $0x1c] sm:$0xf]
  %v549 = vld [vmem:[%s540 + $0x20] sm:$0xf]
  %v550 = vld [vmem:[%s540 + $0x24] sm:$0xf]
  %v551 = vld [vmem:[%s540 + $0x28] sm:$0xf]
  %v552 = vld [vmem:[%s540 + $0x2c] sm:$0xf]
  %v553 = vld [vmem:[%s540 + $0x30] sm:$0xf]
  %v554 = vld [vmem:[%s540 + $0x34] sm:$0xf]
  %v555 = vld [vmem:[%s540 + $0x38] sm:$0xf]
  %v556 = vld [vmem:[%s540 + $0x3c] sm:$0xf]
  %v573 = vunpack.c.l.b16 %v541
  %v574 = vunpack.c.l.b16 %v542
  %v575 = vunpack.c.l.b16 %v543
  %v576 = vunpack.c.l.b16 %v544
  %v577 = vunpack.c.l.b16 %v545
  %v578 = vunpack.c.l.b16 %v546
  %v579 = vunpack.c.l.b16 %v547
  %v580 = vunpack.c.l.b16 %v548
  %v581 = vunpack.c.l.b16 %v549
  %v582 = vunpack.c.l.b16 %v550
  %v583 = vunpack.c.l.b16 %v551
  %v584 = vunpack.c.l.b16 %v552
  %v585 = vunpack.c.l.b16 %v553
  %v586 = vunpack.c.l.b16 %v554
  %v587 = vunpack.c.l.b16 %v555
  %v588 = vunpack.c.l.b16 %v556
  %v589 = vpack.c.b16 %v574, %v573
  %v590 = vpack.c.b16 %v576, %v575
  %v591 = vpack.c.b16 %v578, %v577
  %v592 = vpack.c.b16 %v580, %v579
  %v593 = vpack.c.b16 %v582, %v581
  %v594 = vpack.c.b16 %v584, %v583
  %v595 = vpack.c.b16 %v586, %v585
  %v596 = vpack.c.b16 %v588, %v587
  %605 = vmatpush.bf16.msra.mxu0 %v596
  %606 = vmatpush.bf16.msra.mxu0 %v595
  %607 = vmatpush.bf16.msra.mxu0 %v594
  %608 = vmatpush.bf16.msra.mxu0 %v593
  %609 = vmatpush.bf16.msra.mxu0 %v592
  %610 = vmatpush.bf16.msra.mxu0 %v591
  %611 = vmatpush.bf16.msra.mxu0 %v590
  %612 = vmatpush.bf16.msra.mxu0 %v589
  %613 = vmatmul.bf16.gmra.mxu0 %v532
  %v614 = vpop.f32.mrf.mxu0
  %v615 = vadd.f32 0.0, %v614
  %v616 = vpop.f32.mrf.mxu0
  %v617 = vadd.f32 0.0, %v616
  %618 = vmatmul.bf16.gmra.mxu0 %v533
  %v619 = vpop.f32.mrf.mxu0
  %v620 = vadd.f32 0.0, %v619
  %v621 = vpop.f32.mrf.mxu0
  %v622 = vadd.f32 0.0, %v621
  %623 = vmatmul.bf16.gmra.mxu0 %v534
  %v624 = vpop.f32.mrf.mxu0
  %v625 = vadd.f32 0.0, %v624
  %v626 = vpop.f32.mrf.mxu0
  %v627 = vadd.f32 0.0, %v626
  %628 = vmatmul.bf16.gmra.mxu0 %v535
  %v629 = vpop.f32.mrf.mxu0
  %v630 = vadd.f32 0.0, %v629
  %v631 = vpop.f32.mrf.mxu0
  %v632 = vadd.f32 0.0, %v631
  %633 = vmatmul.bf16.gmra.mxu0 %v536
  %v634 = vpop.f32.mrf.mxu0
  %v635 = vadd.f32 0.0, %v634
  %v636 = vpop.f32.mrf.mxu0
  %v637 = vadd.f32 0.0, %v636
  %638 = vmatmul.bf16.gmra.mxu0 %v537
  %v639 = vpop.f32.mrf.mxu0
  %v640 = vadd.f32 0.0, %v639
  %v641 = vpop.f32.mrf.mxu0
  %v642 = vadd.f32 0.0, %v641
  %643 = vmatmul.bf16.gmra.mxu0 %v538
  %v644 = vpop.f32.mrf.mxu0
  %v645 = vadd.f32 0.0, %v644
  %v646 = vpop.f32.mrf.mxu0
  %v647 = vadd.f32 0.0, %v646
  %648 = vmatmul.bf16.gmra.mxu0 %v539
  %v649 = vpop.f32.mrf.mxu0
  %v650 = vadd.f32 0.0, %v649
  %v651 = vpop.f32.mrf.mxu0
  %v652 = vadd.f32 0.0, %v651
  %653 = vdwg.mxu0
  %v654 = vpack.c.bf16 %v617, %v615
  %v655 = vpack.c.bf16 %v622, %v620
  %v656 = vpack.c.bf16 %v627, %v625
  %v657 = vpack.c.bf16 %v632, %v630
  %v658 = vpack.c.bf16 %v637, %v635
  %v659 = vpack.c.bf16 %v642, %v640
  %v660 = vpack.c.bf16 %v647, %v645
  %v661 = vpack.c.bf16 %v652, %v650
  %v662 = vperm.slane %v52, 2
  %663 = vmatpush.bf16.msra.mxu0 %v661
  %664 = vmatpush.bf16.msra.mxu0 %v660
  %665 = vmatpush.bf16.msra.mxu0 %v659
  %666 = vmatpush.bf16.msra.mxu0 %v658
  %667 = vmatpush.bf16.msra.mxu0 %v657
  %668 = vmatpush.bf16.msra.mxu0 %v656
  %669 = vmatpush.bf16.msra.mxu0 %v655
  %670 = vmatpush.bf16.msra.mxu0 %v654
  %671 = vmatmul.bf16.gmra.mxu0 %v255
  %v672 = vpop.f32.mrf.mxu0
  %v673 = vadd.f32 %v662, %v672
  %v674 = vpop.f32.mrf.mxu0
  %v675 = vadd.f32 %v662, %v674
  %676 = vmatmul.bf16.gmra.mxu0 %v256
  %v677 = vpop.f32.mrf.mxu0
  %v678 = vadd.f32 %v662, %v677
  %v679 = vpop.f32.mrf.mxu0
  %v680 = vadd.f32 %v662, %v679
  %681 = vmatmul.bf16.gmra.mxu0 %v257
  %v682 = vpop.f32.mrf.mxu0
  %v683 = vadd.f32 %v662, %v682
  %v684 = vpop.f32.mrf.mxu0
  %v685 = vadd.f32 %v662, %v684
  %686 = vmatmul.bf16.gmra.mxu0 %v258
  %v687 = vpop.f32.mrf.mxu0
  %v688 = vadd.f32 %v662, %v687
  %v689 = vpop.f32.mrf.mxu0
  %v690 = vadd.f32 %v662, %v689
  %691 = vmatmul.bf16.gmra.mxu0 %v259
  %v692 = vpop.f32.mrf.mxu0
  %v693 = vadd.f32 %v662, %v692
  %v694 = vpop.f32.mrf.mxu0
  %v695 = vadd.f32 %v662, %v694
  %696 = vmatmul.bf16.gmra.mxu0 %v260
  %v697 = vpop.f32.mrf.mxu0
  %v698 = vadd.f32 %v662, %v697
  %v699 = vpop.f32.mrf.mxu0
  %v700 = vadd.f32 %v662, %v699
  %701 = vmatmul.bf16.gmra.mxu0 %v261
  %v702 = vpop.f32.mrf.mxu0
  %v703 = vadd.f32 %v662, %v702
  %v704 = vpop.f32.mrf.mxu0
  %v705 = vadd.f32 %v662, %v704
  %706 = vmatmul.bf16.gmra.mxu0 %v262
  %v707 = vpop.f32.mrf.mxu0
  %v708 = vadd.f32 %v662, %v707
  %v709 = vpop.f32.mrf.mxu0
  %v710 = vadd.f32 %v662, %v709
  %711 = vdwg.mxu0
  %v712 = vmax.f32 %v673, 0.0
  %v713 = vmax.f32 %v675, 0.0
  %v714 = vmax.f32 %v678, 0.0
  %v715 = vmax.f32 %v680, 0.0
  %v716 = vmax.f32 %v683, 0.0
  %v717 = vmax.f32 %v685, 0.0
  %v718 = vmax.f32 %v688, 0.0
  %v719 = vmax.f32 %v690, 0.0
  %v720 = vmax.f32 %v693, 0.0
  %v721 = vmax.f32 %v695, 0.0
  %v722 = vmax.f32 %v698, 0.0
  %v723 = vmax.f32 %v700, 0.0
  %v724 = vmax.f32 %v703, 0.0
  %v725 = vmax.f32 %v705, 0.0
  %v726 = vmax.f32 %v708, 0.0
  %v727 = vmax.f32 %v710, 0.0
  %v728 = vpack.c.bf16 %v713, %v712
  %v729 = vpack.c.bf16 %v715, %v714
  %v730 = vpack.c.bf16 %v717, %v716
  %v731 = vpack.c.bf16 %v719, %v718
  %v732 = vpack.c.bf16 %v721, %v720
  %v733 = vpack.c.bf16 %v723, %v722
  %v734 = vpack.c.bf16 %v725, %v724
  %v735 = vpack.c.bf16 %v727, %v726
  %v736 = vld [vmem:[%s4] sm:$0xf]
  %737 = vmatpush.bf16.msra.mxu0 %v735
  %738 = vmatpush.bf16.msra.mxu0 %v734
  %739 = vmatpush.bf16.msra.mxu0 %v733
  %740 = vmatpush.bf16.msra.mxu0 %v732
  %741 = vmatpush.bf16.msra.mxu0 %v731
  %742 = vmatpush.bf16.msra.mxu0 %v730
  %743 = vmatpush.bf16.msra.mxu0 %v729
  %744 = vmatpush.bf16.msra.mxu0 %v728
  %745 = vmatmul.bf16.gmra.mxu0 %v736
  %v746 = vpop.f32.mrf.mxu0
  %v747 = vadd.f32 0.0, %v746
  %v748 = vpop.f32.mrf.mxu0
  %749 = vdwg.mxu0
  %750 = vst [vmem:[%s5] sm:$0xff] %v747
  // Predicated region
  $region22: #{gnn_encoder_forward.1} parent=0 // pred_check
    _
  $region23: #{gnn_encoder_forward.1} parent=0 // pred_check_branch
    %752 = sbr.rel (0) target = $region25
  $region24: #{gnn_encoder_forward.1} parent=0 // pred_region
    _
  $region25: #{gnn_encoder_forward.1} parent=0 // pred_fallthru
    _
  // Predicated region
  $region26: #{gnn_encoder_forward.1} parent=0 // pred_check
    _
  $region27: #{gnn_encoder_forward.1} parent=0 // pred_check_branch
    %754 = sbr.rel (0) target = $region29
  $region28: #{gnn_encoder_forward.1} parent=0 // pred_region
    _
  $region29: #{gnn_encoder_forward.1} parent=0 // pred_fallthru
    _

</llo_original>
